<compile_context>
chip_gen: v6e
topology: v6e:2x2x1
jax: 0.10.0
libtpu: 0.0.40
codegen_flags: <defaults>
</compile_context>

<pallas_src>
import functools

import jax
import jax.numpy as jnp
import numpy as np
from jax import lax
from jax.experimental import pallas as pl
from jax.experimental.pallas import tpu as pltpu

_SUBLANE = 8
_LANE = 128


def _round_up(x, m):
    return (x + m - 1) // m * m


def _vmem_limit_bytes():
    """Generation-aware VMEM limit: ~3/4 of physical capacity, clamped."""
    cap = None
    try:
        cap = getattr(pltpu.get_tpu_info(), "vmem_capacity_bytes", None)
    except Exception:
        cap = None
    if not cap:
        cap = 64 * 1024 * 1024  # conservative default (v7x physical VMEM)
    limit = int(cap) * 3 // 4   # v5e/v6e -> ~96 MiB, v7x -> ~48 MiB
    return max(32 * 1024 * 1024, min(limit, 112 * 1024 * 1024))


def _choose_norm_tile(Sp, D, in_bytes, budget):
    """Row-tile for the (mem-bound) support normalize pass: big blocks."""
    def cost(t):
        return 2 * t * D * in_bytes + 2 * D * t * 2  # double-buffered in + out

    t = min(1024, Sp)
    if cost(t) <= budget:
        return t
    for t in (512, 256, 128):  # multiples of 128 so layout rules always hold
        if cost(t) <= budget:
            return t
    return 128


def _choose_sim_tiling(Q, Sp, D, q_bytes, out_bytes, budget):
    """Pick (tq, ts): prefer a VMEM-resident support panel, large query tiles."""
    def fits(tq, ts):
        return (2 * tq * D * q_bytes          # query block (f32 in)
                + 2 * D * ts * 2              # support panel (bf16)
                + 2 * tq * ts * out_bytes     # output block
                ) <= budget

    tq0 = min(512, _round_up(Q, _SUBLANE))
    # Resident support (DMA'd once) if a >=256-row query tile still fits.
    if fits(min(tq0, 256), Sp):
        ts = Sp
    else:
        ts = 4096
        while ts > _LANE and not fits(_LANE, ts):
            ts //= 2
    tq = tq0
    while tq > _SUBLANE and not fits(tq, ts):
        tq = max(_SUBLANE, _round_up(tq // 2, _SUBLANE))
    return tq, ts


# ---------------------------------------------------------------------------
# Stage 1: support prep -- L2 normalize (f32) and store transposed bf16 panel.
# ---------------------------------------------------------------------------
def _support_prep_kernel(s_ref, out_ref):
    s = s_ref[...].astype(jnp.float32)                        # [t, D]
    sumsq = jnp.sum(s * s, axis=-1, keepdims=True)            # XLU reduce
    sn = s * lax.rsqrt(jnp.maximum(sumsq, jnp.float32(1e-24)))  # EUP rsqrt
    # One-time transpose here (mem-bound stage) so stage 2 feeds the MXU in its
    # native (tq, D) x (D, ts) layout -- no per-block RHS transpose.
    out_ref[...] = jnp.transpose(sn).astype(out_ref.dtype)    # [D, t] bf16


def _prep_support(support, Sp, D, vmem_limit):
    budget = max(vmem_limit - (4 << 20), 4 << 20)
    in_bytes = jnp.dtype(support.dtype).itemsize
    t = _choose_norm_tile(Sp, D, in_bytes, budget)
    n = pl.cdiv(Sp, t)
    return pl.pallas_call(
        _support_prep_kernel,
        out_shape=jax.ShapeDtypeStruct((D, Sp), jnp.bfloat16),
        grid=(n,),
        in_specs=[pl.BlockSpec((t, D), lambda i: (i, 0))],
        out_specs=pl.BlockSpec((D, t), lambda i: (0, i)),
        compiler_params=pltpu.CompilerParams(
            dimension_semantics=("parallel",),
            vmem_limit_bytes=vmem_limit,
        ),
    )(support)


# ---------------------------------------------------------------------------
# Stage 2: fused query normalize + MXU matmul (+ optional exact-L2 epilogue).
#   apply_sqrt=False : raw dot products (== cosine on unit-norm features; also
#                      the ranking surrogate for -cdist since it is monotone).
#   apply_sqrt=True  : -cdist = -sqrt(2 - 2*dot) on unit-norm features.
# ---------------------------------------------------------------------------
def _sim_kernel(q_ref, snT_ref, out_ref, *, apply_sqrt):
    q = q_ref[...].astype(jnp.float32)                          # [tq, D]
    qsq = jnp.sum(q * q, axis=-1, keepdims=True)
    qn = (q * lax.rsqrt(jnp.maximum(qsq, jnp.float32(1e-24)))
          ).astype(jnp.bfloat16)
    dots = jnp.dot(qn, snT_ref[...],                            # [tq, ts]
                   preferred_element_type=jnp.float32)
    if apply_sqrt:
        dots = -jnp.sqrt(jnp.maximum(2.0 - 2.0 * dots, 0.0))
    out_ref[...] = dots.astype(out_ref.dtype)


def pallas_similarity(query_features, support_features, use_cosine=False,
                      exact_distance=True, out_dtype=jnp.float32,
                      q_tile=None, s_tile=None):
    """[n_query, n_support] similarity matrix.

    use_cosine=True            -> cosine similarity.
    use_cosine=False           -> -||q - s||_2 if exact_distance else the raw
                                  dot product (same argsort order).
    """
    Q, D = query_features.shape
    S, Ds = support_features.shape
    assert D == Ds

    vmem_limit = _vmem_limit_bytes()
    budget = max(vmem_limit - (4 << 20), 4 << 20)
    Sp = _round_up(S, _SUBLANE)

    # Stage 1: normalized, transposed bf16 support panel (D, Sp).
    snT = _prep_support(support_features, Sp, D, vmem_limit)

    out_bytes = jnp.dtype(out_dtype).itemsize
    q_bytes = jnp.dtype(query_features.dtype).itemsize
    tq, ts = _choose_sim_tiling(Q, Sp, D, q_bytes, out_bytes, budget)
    if q_tile is not None:
        tq = q_tile
    if s_tile is not None:
        ts = s_tile
    assert tq % _SUBLANE == 0
    assert ts == Sp or ts % _LANE == 0

    n_q = pl.cdiv(Q, tq)
    n_s = pl.cdiv(Sp, ts)
    Qp = n_q * tq

    apply_sqrt = (not use_cosine) and exact_distance
    kernel = functools.partial(_sim_kernel, apply_sqrt=apply_sqrt)
    sim = pl.pallas_call(
        kernel,
        out_shape=jax.ShapeDtypeStruct((Qp, Sp), out_dtype),
        grid=(n_q, n_s),
        in_specs=[
            pl.BlockSpec((tq, D), lambda i, j: (i, 0)),
            # Constant block index when n_s == 1 => the support panel is DMA'd
            # from HBM once and stays VMEM-resident across all query tiles.
            pl.BlockSpec((D, ts), lambda i, j: (0, j)),
        ],
        out_specs=pl.BlockSpec((tq, ts), lambda i, j: (i, j)),
        compiler_params=pltpu.CompilerParams(
            dimension_semantics=("parallel", "parallel"),
            vmem_limit_bytes=vmem_limit,
        ),
    )(query_features, snT)

    if Qp != Q or Sp != S:
        sim = sim[:Q, :S]
    return sim


# ---------------------------------------------------------------------------
# Host-side NCM.forward (top-k accuracy bookkeeping over label tuples).
# ---------------------------------------------------------------------------
def ncm_forward(support_features, query_features, support_labels, query_labels,
                top_k=1, use_cosine=False):
    """Mirrors NCM.forward: top-k accuracy over unique query indices.

    Ranking only needs a monotone surrogate of the similarity: on unit-norm
    features -cdist = -sqrt(2 - 2*dot) is strictly increasing in the dot
    product, so the sqrt epilogue is skipped and the matrix is emitted in bf16
    (halves output HBM writeback); the argsort result is identical.
    """
    sim = pallas_similarity(query_features, support_features,
                            use_cosine=use_cosine, exact_distance=False,
                            out_dtype=jnp.bfloat16)
    sim = np.asarray(jax.device_get(jax.block_until_ready(sim))
                     ).astype(np.float32)                       # [Q, S]

    acc = 0
    visited = set()
    for i, (query_class, query_index) in enumerate(query_labels):
        if query_index not in visited:
            visited.add(query_index)
            indices = [j for j, (_c, idx) in enumerate(query_labels)
                       if idx == query_index]
            query_similarity = sim[indices, :]
            n_masks, n_shot = query_similarity.shape
            flat = query_similarity.flatten()
            sorted_indices = np.argsort(-flat, kind="stable")
            top_k_indices = sorted_indices[:top_k]
            top_k_masks = top_k_indices // n_shot   # noqa: F841 (parity w/ torch)
            top_k_support = top_k_indices % n_shot
            top_k_classes = [support_labels[k][0] for k in top_k_support]
            if query_class in top_k_classes:
                acc += 1
    return acc / len(visited)


if __name__ == "__main__":
    key = jax.random.PRNGKey(0)
    k_sup, k_qry, k_sup2, k_qry2 = jax.random.split(key, 4)

    # --- small NCM-sized problem (matches the torch module's usage) ---------
    n_support, n_query, feat_dim = 16, 16, 128
    support_features = jax.random.normal(k_sup, (n_support, feat_dim), jnp.float32)
    query_features = jax.random.normal(k_qry, (n_query, feat_dim), jnp.float32)

    support_labels = [(i % 4, i) for i in range(n_support)]
    # 8 unique query images (indices), 2 masks each.
    query_labels = [(i % 4, i // 2) for i in range(n_query)]

    # Pure-JAX reference for the similarity kernels.
    def ref_sim(q, s, use_cosine):
        qn = q / jnp.maximum(jnp.linalg.norm(q, axis=-1, keepdims=True), 1e-12)
        sn = s / jnp.maximum(jnp.linalg.norm(s, axis=-1, keepdims=True), 1e-12)
        d = qn @ sn.T
        return d if use_cosine else -jnp.sqrt(jnp.maximum(2.0 - 2.0 * d, 0.0))

    for uc in (False, True):
        got = pallas_similarity(query_features, support_features,
                                use_cosine=uc, exact_distance=True,
                                out_dtype=jnp.float32)
        want = ref_sim(query_features, support_features, uc)
        np.testing.assert_allclose(np.asarray(got), np.asarray(want),
                                   atol=5e-2, rtol=5e-2)  # bf16 MXU feed

    # --- boundary coverage: multi-tile grid, partial tiles, tiled support ---
    Q2, S2 = 272, 144
    qf2 = jax.random.normal(k_qry2, (Q2, feat_dim), jnp.float32)
    sf2 = jax.random.normal(k_sup2, (S2, feat_dim), jnp.float32)
    got2 = pallas_similarity(qf2, sf2, use_cosine=True,
                             q_tile=128, s_tile=128)
    want2 = ref_sim(qf2, sf2, True)
    np.testing.assert_allclose(np.asarray(got2), np.asarray(want2),
                               atol=5e-2, rtol=5e-2)

    acc_l2 = ncm_forward(support_features, query_features, support_labels,
                         query_labels, top_k=1, use_cosine=False)
    acc_cos = ncm_forward(support_features, query_features, support_labels,
                          query_labels, top_k=1, use_cosine=True)
    assert 0.0 <= acc_l2 <= 1.0 and 0.0 <= acc_cos <= 1.0

    jax.block_until_ready(pallas_similarity(query_features, support_features))
    print("KERNEL_OK")
</pallas_src>

<mosaic_0001>
module attributes {stable_mosaic.version = 11 : i64} {
  func.func @_support_prep_kernel(%arg0: i32, %arg1: memref<16x128xf32, #tpu.memory_space<vmem>>, %arg2: memref<128x16xbf16, #tpu.memory_space<vmem>>) attributes {dimension_semantics = [#tpu.dimension_semantics<parallel>], iteration_bounds = array<i64: 1>, scalar_prefetch = 0 : i64, scratch_operands = 0 : i64, tpu.core_type = #tpu.core_type<tc>, window_params = [{transform_indices = @transform_0, window_bounds = array<i64: 16, 128>}, {transform_indices = @transform_1, window_bounds = array<i64: 128, 16>}]} {
    %c0 = arith.constant 0 : index
    %c0_0 = arith.constant 0 : index
    %0 = vector.load %arg1[%c0, %c0_0] : memref<16x128xf32, #tpu.memory_space<vmem>>, vector<16x128xf32>
    %1 = arith.mulf %0, %0 : vector<16x128xf32>
    %cst = arith.constant dense<0.000000e+00> : vector<16xf32>
    %2 = vector.multi_reduction <add>, %1, %cst [1] : vector<16x128xf32> to vector<16xf32>
    %3 = vector.shape_cast %2 : vector<16xf32> to vector<16x1xf32>
    %cst_1 = arith.constant 1.000000e-24 : f32
    %4 = vector.broadcast %cst_1 : f32 to vector<16x1xf32>
    %5 = arith.maximumf %3, %4 : vector<16x1xf32>
    %6 = math.rsqrt %5 : vector<16x1xf32>
    %7 = vector.broadcast %6 : vector<16x1xf32> to vector<16x128xf32>
    %8 = arith.mulf %0, %7 : vector<16x128xf32>
    %9 = tpu.transpose %8, [1, 0] : vector<16x128xf32> -> vector<128x16xf32>
    %10 = arith.truncf %9 : vector<128x16xf32> to vector<128x16xbf16>
    %c0_2 = arith.constant 0 : index
    %c0_3 = arith.constant 0 : index
    %11 = vector.load %arg2[%c0_2, %c0_3] : memref<128x16xbf16, #tpu.memory_space<vmem>>, vector<128x16xbf16>
    tpu.vector_store %arg2[%c0_2, %c0_3], %10 {strides = array<i32>} : memref<128x16xbf16, #tpu.memory_space<vmem>>, vector<128x16xbf16>,
    return
  }
  func.func @transform_0(%arg0: i32) -> (i32, i32) {
    %c0_i32 = arith.constant 0 : i32
    %c0_i32_0 = arith.constant 0 : i32
    return %arg0, %c0_i32 : i32, i32
  }
  func.func @transform_1(%arg0: i32) -> (i32, i32) {
    %c0_i32 = arith.constant 0 : i32
    %c0_i32_0 = arith.constant 0 : i32
    return %c0_i32, %arg0 : i32, i32
  }
}

</mosaic_0001>

<llo_original>
// kernel: tpu_custom_call.1
$region0: #{tpu_custom_call.1}
  #allocation0 [shape = 'u32[]', space=smem, size = 0x4, offset = 0x4, fixed_abs, tag = 'smem constant byte address 0x4 - core index']
  #allocation1 [shape = 'u32[144,128]{1,0:T(1,128)}', space=vmem, size = 0x12000, scoped, tag = 'internal scratch']
  %s0 = inlined_call_operand.hbm [shape: f32[16,128], index: 0, kind: input, shape index: {}]
  %s1 = inlined_call_operand.vmem [shape: bf16[128,16], index: 1, kind: output, shape index: {}]
  %s2 = sld [smem:[#allocation0]]
  $region18: #{tpu_custom_call.1} parent=0
    _
  %s4 = ssub.s32 1, %s2
  %s5 = scalar_select 0, %s4, %s2
  $region1: #{tpu_custom_call.1} parent=0
    #allocation2 [shape = 'u8[8192]{0}', space=vmem, size = 0x2000, scoped, tag = 'input window, operand 0, single buffered']
    #allocation3 [shape = 's32[1]{0}', space=sflag, size = 0x4, scoped, tag = 'scoped memory for tpu_custom_call.1']
    %6 = vsyncpa [#allocation3], 0
    // Predicated region
    $region2: #{tpu_custom_call.1} parent=1 // pred_check
      _
    $region3: #{tpu_custom_call.1} parent=1 // pred_check_branch
      %8 = sbr.rel (0) target = $region5
    $region4: #{tpu_custom_call.1} parent=1 // pred_region
      %s10 = ssub.s32 256, 256
      %11 = vsyncadd [#allocation3], %s10
      %s12 = sshll.u32 [#allocation2], 4
      %s13 = int_to_ptr.vmem [resolvable:$true] %s12
      %18 = dma.hbm_to_vmem [thread:$0]  %s0, 256, %s13, [#allocation3], 128, 128, 8
    $region5: #{tpu_custom_call.1} parent=1 // pred_fallthru
      _
    // Predicated region
    $region6: #{tpu_custom_call.1} parent=1 // pred_check
      _
    $region7: #{tpu_custom_call.1} parent=1 // pred_check_branch
      %20 = sbr.rel (0) target = $region9
    $region8: #{tpu_custom_call.1} parent=1 // pred_region
      %21 = dma.done [#allocation3], 256
    $region9: #{tpu_custom_call.1} parent=1 // pred_fallthru
      _
    %v22 = vld [vmem:[#allocation2] sm:$0xff]
    %v23 = vld [vmem:[#allocation2 + $0x8] sm:$0xff]
    %v24 = vmul.f32 %v22, %v22
    %v25 = vmul.f32 %v23, %v23
    %26 = vadd.xlane.f32.xlu0 %v24
    %v27 = vpop.xlane.xlu0 %26
    %28 = vadd.xlane.f32.xlu0 %v25
    %v29 = vpop.xlane.xlu0 %28
    %v30 = vmax.f32 %v27, 1e-24
    %v31 = vmax.f32 %v29, 1e-24
    %v32 = vrsqrt.pop %v30
    %v33 = vrsqrt.pop %v31
    %v34 = vmul.f32 %v22, %v32
    %v35 = vmul.f32 %v23, %v33
    %36 = vxpose.xlu0.b32.start [1/16] %v34, 128
    %37 = vxpose.xlu0.b32.cont [2/16] %v35, 128
    %38 = vxpose.xlu0.b32.cont [3/16] 0.0, 128
    %39 = vxpose.xlu0.b32.cont [4/16] 0.0, 128
    %40 = vxpose.xlu0.b32.cont [5/16] 0.0, 128
    %41 = vxpose.xlu0.b32.cont [6/16] 0.0, 128
    %42 = vxpose.xlu0.b32.cont [7/16] 0.0, 128
    %43 = vxpose.xlu0.b32.cont [8/16] 0.0, 128
    %44 = vxpose.xlu0.b32.cont [9/16] 0.0, 128
    %45 = vxpose.xlu0.b32.cont [10/16] 0.0, 128
    %46 = vxpose.xlu0.b32.cont [11/16] 0.0, 128
    %47 = vxpose.xlu0.b32.cont [12/16] 0.0, 128
    %48 = vxpose.xlu0.b32.cont [13/16] 0.0, 128
    %49 = vxpose.xlu0.b32.cont [14/16] 0.0, 128
    %50 = vxpose.xlu0.b32.cont [15/16] 0.0, 128
    %51 = vxpose.xlu0.b32.end [16/16] 0.0, 128
    %v52 = vpop.trf.xlu0
    %v53 = vpop.trf.xlu0
    %v54 = vpop.trf.xlu0
    %v55 = vpop.trf.xlu0
    %v56 = vpop.trf.xlu0
    %v57 = vpop.trf.xlu0
    %v58 = vpop.trf.xlu0
    %v59 = vpop.trf.xlu0
    %v60 = vpop.trf.xlu0
    %v61 = vpop.trf.xlu0
    %v62 = vpop.trf.xlu0
    %v63 = vpop.trf.xlu0
    %v64 = vpop.trf.xlu0
    %v65 = vpop.trf.xlu0
    %v66 = vpop.trf.xlu0
    %v67 = vpop.trf.xlu0
    %v68 = vpack.c.bf16 %v53, %v52
    %v69 = vpack.c.bf16 %v55, %v54
    %v70 = vpack.c.bf16 %v57, %v56
    %v71 = vpack.c.bf16 %v59, %v58
    %v72 = vpack.c.bf16 %v61, %v60
    %v73 = vpack.c.bf16 %v63, %v62
    %v74 = vpack.c.bf16 %v65, %v64
    %v75 = vpack.c.bf16 %v67, %v66
    %v84 = vunpack.c.l.b16 %v68
    %v85 = vunpack.c.h.b16 %v68
    %v86 = vunpack.c.l.b16 %v69
    %v87 = vunpack.c.h.b16 %v69
    %v88 = vunpack.c.l.b16 %v70
    %v89 = vunpack.c.h.b16 %v70
    %v90 = vunpack.c.l.b16 %v71
    %v91 = vunpack.c.h.b16 %v71
    %v92 = vunpack.c.l.b16 %v72
    %v93 = vunpack.c.h.b16 %v72
    %v94 = vunpack.c.l.b16 %v73
    %v95 = vunpack.c.h.b16 %v73
    %v96 = vunpack.c.l.b16 %v74
    %v97 = vunpack.c.h.b16 %v74
    %v98 = vunpack.c.l.b16 %v75
    %v99 = vunpack.c.h.b16 %v75
    %v100 = vpack.c.b16 %v84, %v84
    %v101 = vpack.c.b16 %v85, %v85
    %v102 = vpack.c.b16 %v86, %v86
    %v103 = vpack.c.b16 %v87, %v87
    %v104 = vpack.c.b16 %v88, %v88
    %v105 = vpack.c.b16 %v89, %v89
    %v106 = vpack.c.b16 %v90, %v90
    %v107 = vpack.c.b16 %v91, %v91
    %v108 = vpack.c.b16 %v92, %v92
    %v109 = vpack.c.b16 %v93, %v93
    %v110 = vpack.c.b16 %v94, %v94
    %v111 = vpack.c.b16 %v95, %v95
    %v112 = vpack.c.b16 %v96, %v96
    %v113 = vpack.c.b16 %v97, %v97
    %v114 = vpack.c.b16 %v98, %v98
    %v115 = vpack.c.b16 %v99, %v99
    %vm132 = vcmask 125952
    %133 = vst.msk [vmem:[%s1] sm:$0xf] %vm132, %v100
    %134 = vst.msk [vmem:[%s1 + $0x4] sm:$0xf] %vm132, %v101
    %135 = vst.msk [vmem:[%s1 + $0x8] sm:$0xf] %vm132, %v102
    %136 = vst.msk [vmem:[%s1 + $0xc] sm:$0xf] %vm132, %v103
    %137 = vst.msk [vmem:[%s1 + $0x10] sm:$0xf] %vm132, %v104
    %138 = vst.msk [vmem:[%s1 + $0x14] sm:$0xf] %vm132, %v105
    %139 = vst.msk [vmem:[%s1 + $0x18] sm:$0xf] %vm132, %v106
    %140 = vst.msk [vmem:[%s1 + $0x1c] sm:$0xf] %vm132, %v107
    %141 = vst.msk [vmem:[%s1 + $0x20] sm:$0xf] %vm132, %v108
    %142 = vst.msk [vmem:[%s1 + $0x24] sm:$0xf] %vm132, %v109
    %143 = vst.msk [vmem:[%s1 + $0x28] sm:$0xf] %vm132, %v110
    %144 = vst.msk [vmem:[%s1 + $0x2c] sm:$0xf] %vm132, %v111
    %145 = vst.msk [vmem:[%s1 + $0x30] sm:$0xf] %vm132, %v112
    %146 = vst.msk [vmem:[%s1 + $0x34] sm:$0xf] %vm132, %v113
    %147 = vst.msk [vmem:[%s1 + $0x38] sm:$0xf] %vm132, %v114
    %148 = vst.msk [vmem:[%s1 + $0x3c] sm:$0xf] %vm132, %v115
    // Predicated region
    $region10: #{tpu_custom_call.1} parent=1 // pred_check
      _
    $region11: #{tpu_custom_call.1} parent=1 // pred_check_branch
      %150 = sbr.rel (0) target = $region13
    $region12: #{tpu_custom_call.1} parent=1 // pred_region
      _
    $region13: #{tpu_custom_call.1} parent=1 // pred_fallthru
      _
    // Predicated region
    $region14: #{tpu_custom_call.1} parent=1 // pred_check
      _
    $region15: #{tpu_custom_call.1} parent=1 // pred_check_branch
      %152 = sbr.rel (0) target = $region17
    $region16: #{tpu_custom_call.1} parent=1 // pred_region
      _
    $region17: #{tpu_custom_call.1} parent=1 // pred_fallthru
      _
    %153 = vsyncpa [#allocation3], 1

</llo_original>
